<compile_context>
chip_gen: v7x
topology: tpu7x:2x2x1
jax: 0.10.0
libtpu: 0.0.40
codegen_flags: <defaults>
</compile_context>

<pallas_src>
import jax
import jax.numpy as jnp
from jax.experimental import pallas as pl
from jax.experimental.pallas import tpu as pltpu

# Synthetic graph-source names (defines num_sources); the module iterates over this.
GRAPH_SOURCES = ("industry", "fund_flow", "news")

_LANE = 128
_DEFAULT_VMEM_BUDGET_BYTES = 12 * 1024 * 1024  # fits v5e's 16 MiB default scoped VMEM


def _round_up(x, m):
    return ((x + m - 1) // m) * m


def _round_down_pos(x, m):
    return max(m, (x // m) * m)


def _detect_num_tensorcores():
    """Best-effort TensorCore count (v7x has 2); defaults to 1."""
    try:
        info = pltpu.get_tpu_info()
        for attr in ("num_cores", "core_count", "num_tensorcores", "tensorcore_count"):
            v = getattr(info, attr, None)
            if isinstance(v, int) and v > 0:
                return v
    except Exception:
        pass
    return 1


def _choose_node_tile(total_nodes, input_dim, fusion_dim, n_src, in_itemsize, *,
                      max_tile_n, vmem_limit_bytes, input_buffer_count,
                      num_tensorcores):
    """Size the node tile from an explicit VMEM budget (lanes = nodes)."""
    if vmem_limit_bytes is not None:
        budget = int(vmem_limit_bytes * 0.75)
    else:
        budget = _DEFAULT_VMEM_BUDGET_BYTES
    try:
        # Clamp by physical VMEM when visible (v7x: 64 MiB vs 128 MiB v5e/v6e).
        cap = pltpu.get_tpu_info().vmem_capacity_bytes
        budget = min(budget, int(cap * 0.5))
    except Exception:
        pass

    n_buf = input_buffer_count if input_buffer_count is not None else 2
    # Per-step VMEM: n_src buffered (D, tn) source tiles + double-buffered
    # lane-dense (F, tn) f32 output tile + resident weight blocks.
    weight_bytes = 2 * 4 * (n_src * input_dim + n_src + fusion_dim * input_dim + fusion_dim)
    per_node_bytes = (n_src * n_buf * input_dim * in_itemsize
                      + 2 * max(fusion_dim, 8) * 4)
    tile_cap = max(_LANE, (budget - weight_bytes) // per_node_bytes)
    tn = min(max_tile_n, _round_down_pos(tile_cap, _LANE))

    # Keep >=num_tensorcores grid steps only when there is more than one TC
    # (v7x megacore sharding); on v5e/v6e take the single largest tile.
    if num_tensorcores > 1 and total_nodes > num_tensorcores * _LANE:
        tn = min(tn, _round_up(pl.cdiv(total_nodes, num_tensorcores), _LANE))

    if total_nodes <= tn:
        return total_nodes          # single full-extent block (any size allowed)
    return tn                       # multiple of 128; tail block is clipped


def _make_fusion_kernel(n_src):
    """Kernel for a fixed (static) number of valid sources.

    Transposed, lane-dense layout (nodes on the lane axis):
      h_s       : (D, TN)   per-source activations (f32 or bf16; upcast in-kernel)
      score_w   : (S, D)    per-source attention weight rows
      score_b   : (S, 1)
      fusion_w_t: (F, D)    fusion weight, transposed
      fusion_b_t: (F, 1)
      out       : (F, TN)   lane-dense output tile
    """

    def kernel(*refs):
        h_refs = refs[:n_src]
        sw_ref, sb_ref, fwt_ref, fbt_ref, o_ref = refs[n_src:]

        # ---- Pass 1: per-source attention scores, lane-dense (1, TN). ----
        # (1, D) @ (D, TN) on the MXU; nodes stay on the lane axis so the
        # softmax runs on ~TN/128 dense vregs instead of TN/8 masked ones.
        scores = []
        for s in range(n_src):
            h = h_refs[s][...].astype(jnp.float32)                     # (D, TN)
            sw_s = sw_ref[s:s + 1, :].astype(jnp.float32)              # (1, D)
            sb_s = sb_ref[s:s + 1, :].astype(jnp.float32)              # (1, 1)
            scores.append(
                jnp.dot(sw_s, h, preferred_element_type=jnp.float32) + sb_s)

        # ---- Softmax over the (small, static) source axis, unrolled. ----
        m = scores[0]
        for sc in scores[1:]:
            m = jnp.maximum(m, sc)
        exps = [jnp.exp(sc - m) for sc in scores]
        denom = exps[0]
        for e in exps[1:]:
            denom = denom + e
        inv = pl.reciprocal(denom, approx=False)       # exact: 1e-5 check below
        attn = [e * inv for e in exps]                 # (1, TN) each

        # ---- Pass 2: out = sum_s attn_s * (W_f @ h_s) + b_f. ----
        # Algebraically identical to W_f @ (sum_s attn_s * h_s); per-source
        # matmuls mean h_s is only ever consumed by the MXU (no (D, TN) f32
        # weighted-sum temporaries / vreg spills) and all elementwise work is
        # on small lane-dense (F, TN) tiles with a lane-dense MXU result.
        fwt = fwt_ref[...].astype(jnp.float32)                          # (F, D)
        acc = attn[0] * jnp.dot(fwt, h_refs[0][...].astype(jnp.float32),
                                preferred_element_type=jnp.float32)     # (F, TN)
        for s in range(1, n_src):
            acc = acc + attn[s] * jnp.dot(
                fwt, h_refs[s][...].astype(jnp.float32),
                preferred_element_type=jnp.float32)

        out = acc + fbt_ref[...].astype(jnp.float32)                    # (F, TN)
        o_ref[...] = out.astype(o_ref.dtype)

    return kernel


def graph_fusion_forward(h_sources_dict, params, batch_size, num_stocks, *,
                         sources_transposed=False, out_dtype=jnp.float32,
                         max_tile_n=4096, vmem_limit_bytes=None,
                         input_buffer_count=None, num_tensorcores=None):
    """JAX/Pallas equivalent of GraphFusionLayer.forward."""
    total_nodes = batch_size * num_stocks
    input_dim, fusion_dim = params["fusion_w"].shape

    # Host-side validity handling (mirrors the torch module): a missing /
    # None / empty / wrong-shaped source gets a -inf score and zero features,
    # i.e. contributes exactly nothing to the softmax-weighted sum -> it is
    # equivalent (and cheaper) to exclude it from the kernel entirely.
    valid_idx, h_list = [], []
    expected_shape = ((input_dim, total_nodes) if sources_transposed
                      else (total_nodes, input_dim))
    for idx, name in enumerate(GRAPH_SOURCES):
        h = h_sources_dict.get(name) if h_sources_dict else None
        if h is None or getattr(h, "size", 0) == 0 or tuple(h.shape) != expected_shape:
            continue
        valid_idx.append(idx)
        h_list.append(h)

    if not valid_idx:
        # TODO(synk): torch produces NaNs when the dict is non-empty but every
        # source is invalid (softmax over all -inf); we return zeros instead.
        return jnp.zeros((total_nodes, fusion_dim), out_dtype)

    n_src = len(valid_idx)
    ref_dtype = h_list[0].dtype
    h_list = [h if h.dtype == ref_dtype else h.astype(ref_dtype) for h in h_list]
    # Layout plumbing: put nodes on the lane axis. Callers that already hold
    # (D, N) activations pass sources_transposed=True and skip this copy.
    if not sources_transposed:
        h_list = [jnp.transpose(h) for h in h_list]                     # (D, N)

    sel = jnp.array(valid_idx)
    sw = jnp.asarray(params["score_w"], jnp.float32)[sel]               # (S, D)
    sb = jnp.asarray(params["score_b"], jnp.float32)[sel]               # (S, 1)
    fwt = jnp.asarray(params["fusion_w"], jnp.float32).T                # (F, D)
    fbt = jnp.asarray(params["fusion_b"], jnp.float32).T                # (F, 1)

    if num_tensorcores is None:
        num_tensorcores = _detect_num_tensorcores()

    tn = _choose_node_tile(
        total_nodes, input_dim, fusion_dim, n_src,
        jnp.dtype(ref_dtype).itemsize,
        max_tile_n=max_tile_n, vmem_limit_bytes=vmem_limit_bytes,
        input_buffer_count=input_buffer_count, num_tensorcores=num_tensorcores)
    grid = (pl.cdiv(total_nodes, tn),)   # tail block is clipped; no jnp.pad copy

    kernel = _make_fusion_kernel(n_src)

    h_spec_kwargs = {}
    if input_buffer_count is not None and input_buffer_count != 2:
        h_spec_kwargs["pipeline_mode"] = pl.Buffered(input_buffer_count)
    h_specs = [pl.BlockSpec((input_dim, tn), lambda i: (0, i), **h_spec_kwargs)
               for _ in range(n_src)]
    w_specs = [
        pl.BlockSpec((n_src, input_dim), lambda i: (0, 0)),       # score_w  (S, D)
        pl.BlockSpec((n_src, 1), lambda i: (0, 0)),               # score_b  (S, 1)
        pl.BlockSpec((fusion_dim, input_dim), lambda i: (0, 0)),  # fusion_wT(F, D)
        pl.BlockSpec((fusion_dim, 1), lambda i: (0, 0)),          # fusion_bT(F, 1)
    ]

    out_t = pl.pallas_call(
        kernel,
        out_shape=jax.ShapeDtypeStruct((fusion_dim, total_nodes), out_dtype),
        grid_spec=pltpu.PrefetchScalarGridSpec(
            num_scalar_prefetch=0,
            grid=grid,
            in_specs=h_specs + w_specs,
            out_specs=pl.BlockSpec((fusion_dim, tn), lambda i: (0, i)),
        ),
        compiler_params=pltpu.CompilerParams(
            dimension_semantics=("parallel",),
            vmem_limit_bytes=vmem_limit_bytes,
        ),
    )(*h_list, sw, sb, fwt, fbt)

    return jnp.transpose(out_t)          # (N, F)


def _reference(h_sources_dict, params, sources=GRAPH_SOURCES):
    """Pure-JAX reference mirroring the torch forward over the present sources."""
    idx = jnp.array([GRAPH_SOURCES.index(s) for s in sources])
    h = jnp.stack([jnp.asarray(h_sources_dict[s], jnp.float32) for s in sources],
                  axis=1)                                                # (N, S, D)
    sw = jnp.asarray(params["score_w"], jnp.float32)[idx]
    sb = jnp.asarray(params["score_b"], jnp.float32)[idx, 0]
    scores = jnp.einsum("nsd,sd->ns", h, sw) + sb
    attn = jax.nn.softmax(scores, axis=1)                                # (N, S)
    fused = jnp.einsum("ns,nsd->nd", attn, h)                            # (N, D)
    return fused @ params["fusion_w"] + params["fusion_b"][0]            # (N, F)


def init_params(key, input_dim, fusion_dim):
    n_src = len(GRAPH_SOURCES)
    k1, k2, k3, k4 = jax.random.split(key, 4)
    # Deterministic synthetic init (stands in for nn.Linear's init).
    return {
        "score_w": jax.random.normal(k1, (n_src, input_dim), jnp.float32) * 0.1,
        "score_b": jax.random.normal(k2, (n_src, 1), jnp.float32) * 0.1,
        "fusion_w": jax.random.normal(k3, (input_dim, fusion_dim), jnp.float32) * 0.1,
        "fusion_b": jax.random.normal(k4, (1, fusion_dim), jnp.float32) * 0.1,
    }


if __name__ == "__main__":
    batch_size = 2
    num_stocks = 32
    input_dim_per_source = 32
    fusion_output_dim = 16
    total_nodes = batch_size * num_stocks

    key = jax.random.PRNGKey(0)
    kp, kx = jax.random.split(key)
    params = init_params(kp, input_dim_per_source, fusion_output_dim)

    xkeys = jax.random.split(kx, len(GRAPH_SOURCES))
    h_sources = {
        s: jax.random.normal(xkeys[i], (total_nodes, input_dim_per_source), jnp.float32)
        for i, s in enumerate(GRAPH_SOURCES)
    }

    # 1) f32 path (exact check against the reference).
    out = jax.block_until_ready(
        graph_fusion_forward(h_sources, params, batch_size, num_stocks))
    ref = _reference(h_sources, params)
    assert out.shape == (total_nodes, fusion_output_dim)
    assert jnp.allclose(out, ref, atol=1e-5, rtol=1e-5), "f32 mismatch vs. reference"

    # 2) bf16 activation path (half the HBM read bytes; kernel upcasts to f32).
    h_bf16 = {s: v.astype(jnp.bfloat16) for s, v in h_sources.items()}
    out_bf16 = jax.block_until_ready(
        graph_fusion_forward(h_bf16, params, batch_size, num_stocks))
    ref_bf16 = _reference(h_bf16, params)
    assert jnp.allclose(out_bf16, ref_bf16, atol=2e-3, rtol=2e-3), "bf16 mismatch"

    # 3) Ragged multi-block path: N=150 with a 128-wide node tile -> 2 grid
    #    steps with a clipped (masked) tail block, no wrapper-side jnp.pad.
    b2, s2 = 5, 30
    n2 = b2 * s2
    xk2 = jax.random.split(jax.random.PRNGKey(1), len(GRAPH_SOURCES))
    h_ragged = {
        s: jax.random.normal(xk2[i], (n2, input_dim_per_source), jnp.float32)
        for i, s in enumerate(GRAPH_SOURCES)
    }
    out_r = jax.block_until_ready(
        graph_fusion_forward(h_ragged, params, b2, s2, max_tile_n=128))
    ref_r = _reference(h_ragged, params)
    assert out_r.shape == (n2, fusion_output_dim)
    assert jnp.allclose(out_r, ref_r, atol=1e-5, rtol=1e-5), "ragged-tail mismatch"

    # 4) Missing-source path (torch: -inf score + zero features == exclude it).
    present = ("industry", "news")
    h_partial = {s: h_sources[s] for s in present}
    out_p = jax.block_until_ready(
        graph_fusion_forward(h_partial, params, batch_size, num_stocks))
    ref_p = _reference(h_partial, params, sources=present)
    assert jnp.allclose(out_p, ref_p, atol=1e-5, rtol=1e-5), "missing-source mismatch"

    print("KERNEL_OK")
</pallas_src>

<mosaic_0001>
module attributes {stable_mosaic.version = 11 : i64} {
  func.func @kernel(%arg0: i32, %arg1: memref<32x64xf32, #tpu.memory_space<vmem>>, %arg2: memref<32x64xf32, #tpu.memory_space<vmem>>, %arg3: memref<32x64xf32, #tpu.memory_space<vmem>>, %arg4: memref<3x32xf32, #tpu.memory_space<vmem>>, %arg5: memref<3x1xf32, #tpu.memory_space<vmem>>, %arg6: memref<16x32xf32, #tpu.memory_space<vmem>>, %arg7: memref<16x1xf32, #tpu.memory_space<vmem>>, %arg8: memref<16x64xf32, #tpu.memory_space<vmem>>) attributes {dimension_semantics = [#tpu.dimension_semantics<parallel>], iteration_bounds = array<i64: 1>, scalar_prefetch = 0 : i64, scratch_operands = 0 : i64, tpu.core_type = #tpu.core_type<tc>, window_params = [{transform_indices = @transform_0, window_bounds = array<i64: 32, 64>}, {transform_indices = @transform_1, window_bounds = array<i64: 32, 64>}, {transform_indices = @transform_2, window_bounds = array<i64: 32, 64>}, {pipeline_mode = #tpu.pipeline_mode<synchronous>, transform_indices = @transform_3, window_bounds = array<i64: 3, 32>}, {pipeline_mode = #tpu.pipeline_mode<synchronous>, transform_indices = @transform_4, window_bounds = array<i64: 3, 1>}, {pipeline_mode = #tpu.pipeline_mode<synchronous>, transform_indices = @transform_5, window_bounds = array<i64: 16, 32>}, {pipeline_mode = #tpu.pipeline_mode<synchronous>, transform_indices = @transform_6, window_bounds = array<i64: 16, 1>}, {transform_indices = @transform_7, window_bounds = array<i64: 16, 64>}]} {
    %c0 = arith.constant 0 : index
    %c0_0 = arith.constant 0 : index
    %0 = vector.load %arg1[%c0, %c0_0] : memref<32x64xf32, #tpu.memory_space<vmem>>, vector<32x64xf32>
    %c0_1 = arith.constant 0 : index
    %c0_2 = arith.constant 0 : index
    %1 = vector.load %arg4[%c0_1, %c0_2] : memref<3x32xf32, #tpu.memory_space<vmem>>, vector<1x32xf32>
    %c0_3 = arith.constant 0 : index
    %c0_4 = arith.constant 0 : index
    %2 = vector.load %arg5[%c0_3, %c0_4] : memref<3x1xf32, #tpu.memory_space<vmem>>, vector<1x1xf32>
    %cst = arith.constant dense<0.000000e+00> : vector<1x64xf32>
    %3 = tpu.matmul %1, %0, %cst {dimension_numbers = #tpu.dot_dimension_numbers<[1], [0], [0], [1], [0, 0, 1, 1], [], []>} : vector<1x32xf32>, vector<32x64xf32>, vector<1x64xf32> -> vector<1x64xf32>
    %4 = vector.broadcast %2 : vector<1x1xf32> to vector<1x64xf32>
    %5 = arith.addf %3, %4 : vector<1x64xf32>
    %c0_5 = arith.constant 0 : index
    %c0_6 = arith.constant 0 : index
    %6 = vector.load %arg2[%c0_5, %c0_6] : memref<32x64xf32, #tpu.memory_space<vmem>>, vector<32x64xf32>
    %c1 = arith.constant 1 : index
    %c0_7 = arith.constant 0 : index
    %7 = vector.load %arg4[%c1, %c0_7] : memref<3x32xf32, #tpu.memory_space<vmem>>, vector<1x32xf32>
    %c1_8 = arith.constant 1 : index
    %c0_9 = arith.constant 0 : index
    %8 = vector.load %arg5[%c1_8, %c0_9] : memref<3x1xf32, #tpu.memory_space<vmem>>, vector<1x1xf32>
    %cst_10 = arith.constant dense<0.000000e+00> : vector<1x64xf32>
    %9 = tpu.matmul %7, %6, %cst_10 {dimension_numbers = #tpu.dot_dimension_numbers<[1], [0], [0], [1], [0, 0, 1, 1], [], []>} : vector<1x32xf32>, vector<32x64xf32>, vector<1x64xf32> -> vector<1x64xf32>
    %10 = vector.broadcast %8 : vector<1x1xf32> to vector<1x64xf32>
    %11 = arith.addf %9, %10 : vector<1x64xf32>
    %c0_11 = arith.constant 0 : index
    %c0_12 = arith.constant 0 : index
    %12 = vector.load %arg3[%c0_11, %c0_12] : memref<32x64xf32, #tpu.memory_space<vmem>>, vector<32x64xf32>
    %c2 = arith.constant 2 : index
    %c0_13 = arith.constant 0 : index
    %13 = vector.load %arg4[%c2, %c0_13] : memref<3x32xf32, #tpu.memory_space<vmem>>, vector<1x32xf32>
    %c2_14 = arith.constant 2 : index
    %c0_15 = arith.constant 0 : index
    %14 = vector.load %arg5[%c2_14, %c0_15] : memref<3x1xf32, #tpu.memory_space<vmem>>, vector<1x1xf32>
    %cst_16 = arith.constant dense<0.000000e+00> : vector<1x64xf32>
    %15 = tpu.matmul %13, %12, %cst_16 {dimension_numbers = #tpu.dot_dimension_numbers<[1], [0], [0], [1], [0, 0, 1, 1], [], []>} : vector<1x32xf32>, vector<32x64xf32>, vector<1x64xf32> -> vector<1x64xf32>
    %16 = vector.broadcast %14 : vector<1x1xf32> to vector<1x64xf32>
    %17 = arith.addf %15, %16 : vector<1x64xf32>
    %18 = arith.maximumf %5, %11 : vector<1x64xf32>
    %19 = arith.maximumf %18, %17 : vector<1x64xf32>
    %20 = arith.subf %5, %19 : vector<1x64xf32>
    %21 = math.exp %20 : vector<1x64xf32>
    %22 = arith.subf %11, %19 : vector<1x64xf32>
    %23 = math.exp %22 : vector<1x64xf32>
    %24 = arith.subf %17, %19 : vector<1x64xf32>
    %25 = math.exp %24 : vector<1x64xf32>
    %26 = arith.addf %21, %23 : vector<1x64xf32>
    %27 = arith.addf %26, %25 : vector<1x64xf32>
    %28 = tpu.reciprocal %27 : vector<1x64xf32> -> vector<1x64xf32>
    %29 = arith.mulf %21, %28 : vector<1x64xf32>
    %30 = arith.mulf %23, %28 : vector<1x64xf32>
    %31 = arith.mulf %25, %28 : vector<1x64xf32>
    %c0_17 = arith.constant 0 : index
    %c0_18 = arith.constant 0 : index
    %32 = vector.load %arg6[%c0_17, %c0_18] : memref<16x32xf32, #tpu.memory_space<vmem>>, vector<16x32xf32>
    %c0_19 = arith.constant 0 : index
    %c0_20 = arith.constant 0 : index
    %33 = vector.load %arg1[%c0_19, %c0_20] : memref<32x64xf32, #tpu.memory_space<vmem>>, vector<32x64xf32>
    %cst_21 = arith.constant dense<0.000000e+00> : vector<16x64xf32>
    %34 = tpu.matmul %32, %33, %cst_21 {dimension_numbers = #tpu.dot_dimension_numbers<[1], [0], [0], [1], [0, 0, 1, 1], [], []>} : vector<16x32xf32>, vector<32x64xf32>, vector<16x64xf32> -> vector<16x64xf32>
    %35 = vector.broadcast %29 : vector<1x64xf32> to vector<16x64xf32>
    %36 = arith.mulf %35, %34 : vector<16x64xf32>
    %c0_22 = arith.constant 0 : index
    %c0_23 = arith.constant 0 : index
    %37 = vector.load %arg2[%c0_22, %c0_23] : memref<32x64xf32, #tpu.memory_space<vmem>>, vector<32x64xf32>
    %cst_24 = arith.constant dense<0.000000e+00> : vector<16x64xf32>
    %38 = tpu.matmul %32, %37, %cst_24 {dimension_numbers = #tpu.dot_dimension_numbers<[1], [0], [0], [1], [0, 0, 1, 1], [], []>} : vector<16x32xf32>, vector<32x64xf32>, vector<16x64xf32> -> vector<16x64xf32>
    %39 = vector.broadcast %30 : vector<1x64xf32> to vector<16x64xf32>
    %40 = arith.mulf %39, %38 : vector<16x64xf32>
    %41 = arith.addf %36, %40 : vector<16x64xf32>
    %c0_25 = arith.constant 0 : index
    %c0_26 = arith.constant 0 : index
    %42 = vector.load %arg3[%c0_25, %c0_26] : memref<32x64xf32, #tpu.memory_space<vmem>>, vector<32x64xf32>
    %cst_27 = arith.constant dense<0.000000e+00> : vector<16x64xf32>
    %43 = tpu.matmul %32, %42, %cst_27 {dimension_numbers = #tpu.dot_dimension_numbers<[1], [0], [0], [1], [0, 0, 1, 1], [], []>} : vector<16x32xf32>, vector<32x64xf32>, vector<16x64xf32> -> vector<16x64xf32>
    %44 = vector.broadcast %31 : vector<1x64xf32> to vector<16x64xf32>
    %45 = arith.mulf %44, %43 : vector<16x64xf32>
    %46 = arith.addf %41, %45 : vector<16x64xf32>
    %c0_28 = arith.constant 0 : index
    %c0_29 = arith.constant 0 : index
    %47 = vector.load %arg7[%c0_28, %c0_29] : memref<16x1xf32, #tpu.memory_space<vmem>>, vector<16x1xf32>
    %48 = vector.broadcast %47 : vector<16x1xf32> to vector<16x64xf32>
    %49 = arith.addf %46, %48 : vector<16x64xf32>
    %c0_30 = arith.constant 0 : index
    %c0_31 = arith.constant 0 : index
    %50 = vector.load %arg8[%c0_30, %c0_31] : memref<16x64xf32, #tpu.memory_space<vmem>>, vector<16x64xf32>
    tpu.vector_store %arg8[%c0_30, %c0_31], %49 {strides = array<i32>} : memref<16x64xf32, #tpu.memory_space<vmem>>, vector<16x64xf32>,
    return
  }
  func.func @transform_0(%arg0: i32) -> (i32, i32) {
    %c0_i32 = arith.constant 0 : i32
    %c0_i32_0 = arith.constant 0 : i32
    return %c0_i32, %arg0 : i32, i32
  }
  func.func @transform_1(%arg0: i32) -> (i32, i32) {
    %c0_i32 = arith.constant 0 : i32
    %c0_i32_0 = arith.constant 0 : i32
    return %c0_i32, %arg0 : i32, i32
  }
  func.func @transform_2(%arg0: i32) -> (i32, i32) {
    %c0_i32 = arith.constant 0 : i32
    %c0_i32_0 = arith.constant 0 : i32
    return %c0_i32, %arg0 : i32, i32
  }
  func.func @transform_3(%arg0: i32) -> (i32, i32) {
    %c0_i32 = arith.constant 0 : i32
    %c0_i32_0 = arith.constant 0 : i32
    %c0_i32_1 = arith.constant 0 : i32
    return %c0_i32, %c0_i32_0 : i32, i32
  }
  func.func @transform_4(%arg0: i32) -> (i32, i32) {
    %c0_i32 = arith.constant 0 : i32
    %c0_i32_0 = arith.constant 0 : i32
    %c0_i32_1 = arith.constant 0 : i32
    return %c0_i32, %c0_i32_0 : i32, i32
  }
  func.func @transform_5(%arg0: i32) -> (i32, i32) {
    %c0_i32 = arith.constant 0 : i32
    %c0_i32_0 = arith.constant 0 : i32
    %c0_i32_1 = arith.constant 0 : i32
    return %c0_i32, %c0_i32_0 : i32, i32
  }
  func.func @transform_6(%arg0: i32) -> (i32, i32) {
    %c0_i32 = arith.constant 0 : i32
    %c0_i32_0 = arith.constant 0 : i32
    %c0_i32_1 = arith.constant 0 : i32
    return %c0_i32, %c0_i32_0 : i32, i32
  }
  func.func @transform_7(%arg0: i32) -> (i32, i32) {
    %c0_i32 = arith.constant 0 : i32
    %c0_i32_0 = arith.constant 0 : i32
    return %c0_i32, %arg0 : i32, i32
  }
}

</mosaic_0001>

<llo_original>
// kernel: tpu_custom_call.1
$region0: #{tpu_custom_call.1}
  #allocation0 [shape = 'u32[]', space=smem, size = 0x4, offset = 0x4, fixed_abs, tag = 'smem constant byte address 0x4 - core index']
  #allocation1 [shape = 'u32[144,128]{1,0:T(1,128)}', space=vmem, size = 0x12000, scoped, tag = 'internal scratch']
  %s0 = inlined_call_operand.hbm [shape: f32[32,64], index: 0, kind: input, shape index: {}]
  %s1 = inlined_call_operand.hbm [shape: f32[32,64], index: 1, kind: input, shape index: {}]
  %s2 = inlined_call_operand.hbm [shape: f32[32,64], index: 2, kind: input, shape index: {}]
  %s3 = inlined_call_operand.vmem [shape: f32[3,32], index: 3, kind: input, shape index: {}]
  %s4 = inlined_call_operand.vmem [shape: f32[3,1], index: 4, kind: input, shape index: {}]
  %s5 = inlined_call_operand.vmem [shape: f32[16,32], index: 5, kind: input, shape index: {}]
  %s6 = inlined_call_operand.vmem [shape: f32[16,1], index: 6, kind: input, shape index: {}]
  %s7 = inlined_call_operand.hbm [shape: f32[16,64], index: 7, kind: output, shape index: {}]
  %s8 = sld [smem:[#allocation0]]
  $region50: #{tpu_custom_call.1} parent=0
    _
  %s10 = ssub.s32 1, %s8
  %s11 = scalar_select 0, %s10, %s8
  $region1: #{tpu_custom_call.1} parent=0
    #allocation2 [shape = 'u8[16384]{0}', space=vmem, size = 0x4000, scoped, tag = 'input window, operand 0, single buffered']
    #allocation3 [shape = 's32[1]{0}', space=sflag, size = 0x4, scoped, tag = 'scoped memory for tpu_custom_call.1']
    #allocation4 [shape = 's32[1]{0}', space=sflag, size = 0x4, scoped, tag = 'scoped memory for tpu_custom_call.1']
    #allocation5 [shape = 'u8[16384]{0}', space=vmem, size = 0x4000, scoped, tag = 'input window, operand 1, single buffered']
    #allocation6 [shape = 's32[1]{0}', space=sflag, size = 0x4, scoped, tag = 'scoped memory for tpu_custom_call.1']
    #allocation7 [shape = 'u8[16384]{0}', space=vmem, size = 0x4000, scoped, tag = 'input window, operand 2, single buffered']
    #allocation8 [shape = 'u8[8192]{0}', space=vmem, size = 0x2000, scoped, tag = 'output window, operand 0, single buffered']
    %12 = vsyncpa [#allocation3], 0
    %13 = vsyncpa [#allocation6], 0
    %14 = vsyncpa [#allocation4], 0
    // Predicated region
    $region2: #{tpu_custom_call.1} parent=1 // pred_check
      _
    $region3: #{tpu_custom_call.1} parent=1 // pred_check_branch
      %16 = sbr.rel (0) target = $region5
    $region4: #{tpu_custom_call.1} parent=1 // pred_region
      %s18 = ssub.s32 512, 512
      %19 = vsyncadd [#allocation3], %s18
      %s20 = sshll.u32 [#allocation2], 4
      %s21 = int_to_ptr.vmem [resolvable:$true] %s20
      %26 = dma.hbm_to_vmem [thread:$0]  %s0, 512, %s21, [#allocation3], 128, 128, 8
    $region5: #{tpu_custom_call.1} parent=1 // pred_fallthru
      _
    // Predicated region
    $region6: #{tpu_custom_call.1} parent=1 // pred_check
      _
    $region7: #{tpu_custom_call.1} parent=1 // pred_check_branch
      %28 = sbr.rel (0) target = $region9
    $region8: #{tpu_custom_call.1} parent=1 // pred_region
      %s30 = ssub.s32 512, 512
      %31 = vsyncadd [#allocation6], %s30
      %s32 = sshll.u32 [#allocation5], 4
      %s33 = int_to_ptr.vmem [resolvable:$true] %s32
      %38 = dma.hbm_to_vmem [thread:$0]  %s1, 512, %s33, [#allocation6], 128, 128, 8
    $region9: #{tpu_custom_call.1} parent=1 // pred_fallthru
      _
    // Predicated region
    $region10: #{tpu_custom_call.1} parent=1 // pred_check
      _
    $region11: #{tpu_custom_call.1} parent=1 // pred_check_branch
      %40 = sbr.rel (0) target = $region13
    $region12: #{tpu_custom_call.1} parent=1 // pred_region
      %s42 = ssub.s32 512, 512
      %43 = vsyncadd [#allocation6], %s42
      %s44 = sshll.u32 [#allocation7], 4
      %s45 = int_to_ptr.vmem [resolvable:$true] %s44
      %50 = dma.hbm_to_vmem [thread:$0]  %s2, 512, %s45, [#allocation6], 128, 128, 8
    $region13: #{tpu_custom_call.1} parent=1 // pred_fallthru
      _
    // Predicated region
    $region14: #{tpu_custom_call.1} parent=1 // pred_check
      _
    $region15: #{tpu_custom_call.1} parent=1 // pred_check_branch
      %52 = sbr.rel (0) target = $region17
    $region16: #{tpu_custom_call.1} parent=1 // pred_region
      _
    $region17: #{tpu_custom_call.1} parent=1 // pred_fallthru
      _
    // Predicated region
    $region18: #{tpu_custom_call.1} parent=1 // pred_check
      _
    $region19: #{tpu_custom_call.1} parent=1 // pred_check_branch
      %54 = sbr.rel (0) target = $region21
    $region20: #{tpu_custom_call.1} parent=1 // pred_region
      _
    $region21: #{tpu_custom_call.1} parent=1 // pred_fallthru
      _
    // Predicated region
    $region22: #{tpu_custom_call.1} parent=1 // pred_check
      _
    $region23: #{tpu_custom_call.1} parent=1 // pred_check_branch
      %56 = sbr.rel (0) target = $region25
    $region24: #{tpu_custom_call.1} parent=1 // pred_region
      _
    $region25: #{tpu_custom_call.1} parent=1 // pred_fallthru
      _
    // Predicated region
    $region26: #{tpu_custom_call.1} parent=1 // pred_check
      _
    $region27: #{tpu_custom_call.1} parent=1 // pred_check_branch
      %58 = sbr.rel (0) target = $region29
    $region28: #{tpu_custom_call.1} parent=1 // pred_region
      _
    $region29: #{tpu_custom_call.1} parent=1 // pred_fallthru
      _
    // Predicated region
    $region30: #{tpu_custom_call.1} parent=1 // pred_check
      _
    $region31: #{tpu_custom_call.1} parent=1 // pred_check_branch
      %60 = sbr.rel (0) target = $region33
    $region32: #{tpu_custom_call.1} parent=1 // pred_region
      %61 = dma.done [#allocation3], 512
    $region33: #{tpu_custom_call.1} parent=1 // pred_fallthru
      _
    // Predicated region
    $region34: #{tpu_custom_call.1} parent=1 // pred_check
      _
    $region35: #{tpu_custom_call.1} parent=1 // pred_check_branch
      %63 = sbr.rel (0) target = $region37
    $region36: #{tpu_custom_call.1} parent=1 // pred_region
      %64 = dma.done [#allocation6], 512
    $region37: #{tpu_custom_call.1} parent=1 // pred_fallthru
      _
    // Predicated region
    $region38: #{tpu_custom_call.1} parent=1 // pred_check
      _
    $region39: #{tpu_custom_call.1} parent=1 // pred_check_branch
      %66 = sbr.rel (0) target = $region41
    $region40: #{tpu_custom_call.1} parent=1 // pred_region
      %67 = dma.done [#allocation6], 512
    $region41: #{tpu_custom_call.1} parent=1 // pred_fallthru
      _
    %v68 = vld [vmem:[#allocation2] sm:$0xff]
    %v69 = vld [vmem:[#allocation2 + $0x8] sm:$0xff]
    %v70 = vld [vmem:[#allocation2 + $0x10] sm:$0xff]
    %v71 = vld [vmem:[#allocation2 + $0x18] sm:$0xff]
    %v72 = vld [vmem:[%s3] sm:$0x1]
    %v73 = vld [vmem:[%s4] sm:$0x1]
    %75 = vset.pattern.permute.xlu0 0
    %76 = vperm.xlu0 %75, %v73
    %v77 = vpop.permute.xlu0 %76
    %vm79 = vcmask 261120
    %v81 = vsel %vm79, %v72, 0
    %83 = vmatprep.subr.mxu0 0.0
    %84 = vmatpush1.msra.mxu0 %v68
    %85 = vmatprep.subr.mxu0 0.0
    %86 = vmatpush1.msra.mxu0 %v69
    %87 = vmatprep.subr.mxu0 0.0
    %88 = vmatpush1.msra.mxu0 %v70
    %89 = vmatprep.subr.mxu0 0.0
    %90 = vmatpush1.msra.mxu0 %v71
    %91 = vmatprep.subr.mxu0 0.0
    %92 = vmatpush1.msra.mxu0 0.0
    %93 = vmatprep.subr.mxu0 0.0
    %94 = vmatpush1.msra.mxu0 0.0
    %95 = vmatprep.subr.mxu0 0.0
    %96 = vmatpush1.msra.mxu0 0.0
    %97 = vmatprep.subr.mxu0 0.0
    %98 = vmatpush1.msra.mxu0 0.0
    %99 = vmatprep.subr.mxu0 0.0
    %100 = vmatpush1.msra.mxu0 0.0
    %101 = vmatprep.subr.mxu0 0.0
    %102 = vmatpush1.msra.mxu0 0.0
    %103 = vmatprep.subr.mxu0 0.0
    %104 = vmatpush1.msra.mxu0 0.0
    %105 = vmatprep.subr.mxu0 0.0
    %106 = vmatpush1.msra.mxu0 0.0
    %107 = vmatprep.subr.mxu0 0.0
    %108 = vmatpush1.msra.mxu0 0.0
    %109 = vmatprep.subr.mxu0 0.0
    %110 = vmatpush1.msra.mxu0 0.0
    %111 = vmatprep.subr.mxu0 0.0
    %112 = vmatpush1.msra.mxu0 0.0
    %113 = vmatprep.subr.mxu0 0.0
    %114 = vmatpush1.msra.mxu0 0.0
    %115 = vmatprep.subr.mxu0 0.0
    %116 = vmatpush1.msra.mxu0 0.0
    %117 = vmatprep.subr.mxu0 0.0
    %118 = vmatpush1.msra.mxu0 0.0
    %119 = vmatprep.subr.mxu0 0.0
    %120 = vmatpush1.msra.mxu0 0.0
    %121 = vmatprep.subr.mxu0 0.0
    %122 = vmatpush1.msra.mxu0 0.0
    %123 = vmatprep.subr.mxu0 0.0
    %124 = vmatpush1.msra.mxu0 0.0
    %125 = vmatprep.subr.mxu0 0.0
    %126 = vmatpush1.msra.mxu0 0.0
    %127 = vmatprep.subr.mxu0 0.0
    %128 = vmatpush1.msra.mxu0 0.0
    %129 = vmatprep.subr.mxu0 0.0
    %130 = vmatpush1.msra.mxu0 0.0
    %131 = vmatprep.subr.mxu0 0.0
    %132 = vmatpush1.msra.mxu0 0.0
    %133 = vmatprep.subr.mxu0 0.0
    %134 = vmatpush1.msra.mxu0 0.0
    %135 = vmatprep.subr.mxu0 0.0
    %136 = vmatpush1.msra.mxu0 0.0
    %137 = vmatprep.subr.mxu0 0.0
    %138 = vmatpush1.msra.mxu0 0.0
    %139 = vmatprep.subr.mxu0 0.0
    %140 = vmatpush1.msra.mxu0 0.0
    %141 = vmatprep.subr.mxu0 0.0
    %142 = vmatpush1.msra.mxu0 0.0
    %143 = vmatprep.subr.mxu0 0.0
    %144 = vmatpush1.msra.mxu0 0.0
    %145 = vmatprep.subr.mxu0 0.0
    %146 = vmatpush1.msra.mxu0 0.0
    %147 = vmatprep.mubr.f32.mxu0 0.0
    %148 = vmatmul.mubr.f32.gmra.mrb[0].mxu0 %v81
    %v149 = vpop.f32.mrb[0].mxu0
    %v150 = vadd.f32 %v77, %v149
    %v151 = vpop.f32.mrb[0].mxu0
    %152 = vdwg.mxu0
    %v153 = vld [vmem:[#allocation5] sm:$0xff]
    %v154 = vld [vmem:[#allocation5 + $0x8] sm:$0xff]
    %v155 = vld [vmem:[#allocation5 + $0x10] sm:$0xff]
    %v156 = vld [vmem:[#allocation5 + $0x18] sm:$0xff]
    %v157 = vld [vmem:[%s3 + $0x1] sm:$0x1]
    %v158 = vld [vmem:[%s4 + $0x1] sm:$0x1]
    %160 = vset.pattern.permute.xlu0 0
    %161 = vperm.xlu0 %160, %v158
    %v162 = vpop.permute.xlu0 %161
    %v165 = vsel %vm79, %v157, 0
    %167 = vmatprep.subr.mxu0 0.0
    %168 = vmatpush1.msra.mxu0 %v153
    %169 = vmatprep.subr.mxu0 0.0
    %170 = vmatpush1.msra.mxu0 %v154
    %171 = vmatprep.subr.mxu0 0.0
    %172 = vmatpush1.msra.mxu0 %v155
    %173 = vmatprep.subr.mxu0 0.0
    %174 = vmatpush1.msra.mxu0 %v156
    %175 = vmatprep.subr.mxu0 0.0
    %176 = vmatpush1.msra.mxu0 0.0
    %177 = vmatprep.subr.mxu0 0.0
    %178 = vmatpush1.msra.mxu0 0.0
    %179 = vmatprep.subr.mxu0 0.0
    %180 = vmatpush1.msra.mxu0 0.0
    %181 = vmatprep.subr.mxu0 0.0
    %182 = vmatpush1.msra.mxu0 0.0
    %183 = vmatprep.subr.mxu0 0.0
    %184 = vmatpush1.msra.mxu0 0.0
    %185 = vmatprep.subr.mxu0 0.0
    %186 = vmatpush1.msra.mxu0 0.0
    %187 = vmatprep.subr.mxu0 0.0
    %188 = vmatpush1.msra.mxu0 0.0
    %189 = vmatprep.subr.mxu0 0.0
    %190 = vmatpush1.msra.mxu0 0.0
    %191 = vmatprep.subr.mxu0 0.0
    %192 = vmatpush1.msra.mxu0 0.0
    %193 = vmatprep.subr.mxu0 0.0
    %194 = vmatpush1.msra.mxu0 0.0
    %195 = vmatprep.subr.mxu0 0.0
    %196 = vmatpush1.msra.mxu0 0.0
    %197 = vmatprep.subr.mxu0 0.0
    %198 = vmatpush1.msra.mxu0 0.0
    %199 = vmatprep.subr.mxu0 0.0
    %200 = vmatpush1.msra.mxu0 0.0
    %201 = vmatprep.subr.mxu0 0.0
    %202 = vmatpush1.msra.mxu0 0.0
    %203 = vmatprep.subr.mxu0 0.0
    %204 = vmatpush1.msra.mxu0 0.0
    %205 = vmatprep.subr.mxu0 0.0
    %206 = vmatpush1.msra.mxu0 0.0
    %207 = vmatprep.subr.mxu0 0.0
    %208 = vmatpush1.msra.mxu0 0.0
    %209 = vmatprep.subr.mxu0 0.0
    %210 = vmatpush1.msra.mxu0 0.0
    %211 = vmatprep.subr.mxu0 0.0
    %212 = vmatpush1.msra.mxu0 0.0
    %213 = vmatprep.subr.mxu0 0.0
    %214 = vmatpush1.msra.mxu0 0.0
    %215 = vmatprep.subr.mxu0 0.0
    %216 = vmatpush1.msra.mxu0 0.0
    %217 = vmatprep.subr.mxu0 0.0
    %218 = vmatpush1.msra.mxu0 0.0
    %219 = vmatprep.subr.mxu0 0.0
    %220 = vmatpush1.msra.mxu0 0.0
    %221 = vmatprep.subr.mxu0 0.0
    %222 = vmatpush1.msra.mxu0 0.0
    %223 = vmatprep.subr.mxu0 0.0
    %224 = vmatpush1.msra.mxu0 0.0
    %225 = vmatprep.subr.mxu0 0.0
    %226 = vmatpush1.msra.mxu0 0.0
    %227 = vmatprep.subr.mxu0 0.0
    %228 = vmatpush1.msra.mxu0 0.0
    %229 = vmatprep.subr.mxu0 0.0
    %230 = vmatpush1.msra.mxu0 0.0
    %231 = vmatprep.mubr.f32.mxu0 0.0
    %232 = vmatmul.mubr.f32.gmra.mrb[0].mxu0 %v165
    %v233 = vpop.f32.mrb[0].mxu0
    %v234 = vadd.f32 %v162, %v233
    %v235 = vpop.f32.mrb[0].mxu0
    %236 = vdwg.mxu0
    %v237 = vld [vmem:[#allocation7] sm:$0xff]
    %v238 = vld [vmem:[#allocation7 + $0x8] sm:$0xff]
    %v239 = vld [vmem:[#allocation7 + $0x10] sm:$0xff]
    %v240 = vld [vmem:[#allocation7 + $0x18] sm:$0xff]
    %v241 = vld [vmem:[%s3 + $0x2] sm:$0x1]
    %v242 = vld [vmem:[%s4 + $0x2] sm:$0x1]
    %244 = vset.pattern.permute.xlu0 0
    %245 = vperm.xlu0 %244, %v242
    %v246 = vpop.permute.xlu0 %245
    %v249 = vsel %vm79, %v241, 0
    %251 = vmatprep.subr.mxu0 0.0
    %252 = vmatpush1.msra.mxu0 %v237
    %253 = vmatprep.subr.mxu0 0.0
    %254 = vmatpush1.msra.mxu0 %v238
    %255 = vmatprep.subr.mxu0 0.0
    %256 = vmatpush1.msra.mxu0 %v239
    %257 = vmatprep.subr.mxu0 0.0
    %258 = vmatpush1.msra.mxu0 %v240
    %259 = vmatprep.subr.mxu0 0.0
    %260 = vmatpush1.msra.mxu0 0.0
    %261 = vmatprep.subr.mxu0 0.0
    %262 = vmatpush1.msra.mxu0 0.0
    %263 = vmatprep.subr.mxu0 0.0
    %264 = vmatpush1.msra.mxu0 0.0
    %265 = vmatprep.subr.mxu0 0.0
    %266 = vmatpush1.msra.mxu0 0.0
    %267 = vmatprep.subr.mxu0 0.0
    %268 = vmatpush1.msra.mxu0 0.0
    %269 = vmatprep.subr.mxu0 0.0
    %270 = vmatpush1.msra.mxu0 0.0
    %271 = vmatprep.subr.mxu0 0.0
    %272 = vmatpush1.msra.mxu0 0.0
    %273 = vmatprep.subr.mxu0 0.0
    %274 = vmatpush1.msra.mxu0 0.0
    %275 = vmatprep.subr.mxu0 0.0
    %276 = vmatpush1.msra.mxu0 0.0
    %277 = vmatprep.subr.mxu0 0.0
    %278 = vmatpush1.msra.mxu0 0.0
    %279 = vmatprep.subr.mxu0 0.0
    %280 = vmatpush1.msra.mxu0 0.0
    %281 = vmatprep.subr.mxu0 0.0
    %282 = vmatpush1.msra.mxu0 0.0
    %283 = vmatprep.subr.mxu0 0.0
    %284 = vmatpush1.msra.mxu0 0.0
    %285 = vmatprep.subr.mxu0 0.0
    %286 = vmatpush1.msra.mxu0 0.0
    %287 = vmatprep.subr.mxu0 0.0
    %288 = vmatpush1.msra.mxu0 0.0
    %289 = vmatprep.subr.mxu0 0.0
    %290 = vmatpush1.msra.mxu0 0.0
    %291 = vmatprep.subr.mxu0 0.0
    %292 = vmatpush1.msra.mxu0 0.0
    %293 = vmatprep.subr.mxu0 0.0
    %294 = vmatpush1.msra.mxu0 0.0
    %295 = vmatprep.subr.mxu0 0.0
    %296 = vmatpush1.msra.mxu0 0.0
    %297 = vmatprep.subr.mxu0 0.0
    %298 = vmatpush1.msra.mxu0 0.0
    %299 = vmatprep.subr.mxu0 0.0
    %300 = vmatpush1.msra.mxu0 0.0
    %301 = vmatprep.subr.mxu0 0.0
    %302 = vmatpush1.msra.mxu0 0.0
    %303 = vmatprep.subr.mxu0 0.0
    %304 = vmatpush1.msra.mxu0 0.0
    %305 = vmatprep.subr.mxu0 0.0
    %306 = vmatpush1.msra.mxu0 0.0
    %307 = vmatprep.subr.mxu0 0.0
    %308 = vmatpush1.msra.mxu0 0.0
    %309 = vmatprep.subr.mxu0 0.0
    %310 = vmatpush1.msra.mxu0 0.0
    %311 = vmatprep.subr.mxu0 0.0
    %312 = vmatpush1.msra.mxu0 0.0
    %313 = vmatprep.subr.mxu0 0.0
    %314 = vmatpush1.msra.mxu0 0.0
    %315 = vmatprep.mubr.f32.mxu0 0.0
    %316 = vmatmul.mubr.f32.gmra.mrb[0].mxu0 %v249
    %v317 = vpop.f32.mrb[0].mxu0
    %v318 = vadd.f32 %v246, %v317
    %v319 = vpop.f32.mrb[0].mxu0
    %320 = vdwg.mxu0
    %v321 = vmax.f32 %v150, %v234
    %v322 = vmax.f32 %v321, %v318
    %v323 = vsub.f32 %v150, %v322
    %v324 = vmul.f32 %v323, 1.442695
    %v325 = vpow.pop %v324
    %v326 = vsub.f32 %v234, %v322
    %v327 = vmul.f32 %v326, 1.442695
    %v328 = vpow.pop %v327
    %v329 = vsub.f32 %v318, %v322
    %v330 = vmul.f32 %v329, 1.442695
    %v331 = vpow.pop %v330
    %v332 = vadd.f32 %v325, %v328
    %v333 = vadd.f32 %v332, %v331
    %v334 = vrcp.pop %v333
    %v335 = vmul.f32 %v325, %v334
    %v336 = vmul.f32 %v328, %v334
    %v337 = vmul.f32 %v331, %v334
    %v338 = vld [vmem:[%s5] sm:$0xff]
    %v339 = vld [vmem:[%s5 + $0x8] sm:$0xff]
    %v341 = vsel %vm79, %v338, 0
    %v344 = vsel %vm79, %v339, 0
    %346 = vmatprep.subr.mxu0 0.0
    %347 = vmatpush1.msra.mxu0 %v68
    %348 = vmatprep.subr.mxu0 0.0
    %349 = vmatpush1.msra.mxu0 %v69
    %350 = vmatprep.subr.mxu0 0.0
    %351 = vmatpush1.msra.mxu0 %v70
    %352 = vmatprep.subr.mxu0 0.0
    %353 = vmatpush1.msra.mxu0 %v71
    %354 = vmatprep.subr.mxu0 0.0
    %355 = vmatpush1.msra.mxu0 0.0
    %356 = vmatprep.subr.mxu0 0.0
    %357 = vmatpush1.msra.mxu0 0.0
    %358 = vmatprep.subr.mxu0 0.0
    %359 = vmatpush1.msra.mxu0 0.0
    %360 = vmatprep.subr.mxu0 0.0
    %361 = vmatpush1.msra.mxu0 0.0
    %362 = vmatprep.subr.mxu0 0.0
    %363 = vmatpush1.msra.mxu0 0.0
    %364 = vmatprep.subr.mxu0 0.0
    %365 = vmatpush1.msra.mxu0 0.0
    %366 = vmatprep.subr.mxu0 0.0
    %367 = vmatpush1.msra.mxu0 0.0
    %368 = vmatprep.subr.mxu0 0.0
    %369 = vmatpush1.msra.mxu0 0.0
    %370 = vmatprep.subr.mxu0 0.0
    %371 = vmatpush1.msra.mxu0 0.0
    %372 = vmatprep.subr.mxu0 0.0
    %373 = vmatpush1.msra.mxu0 0.0
    %374 = vmatprep.subr.mxu0 0.0
    %375 = vmatpush1.msra.mxu0 0.0
    %376 = vmatprep.subr.mxu0 0.0
    %377 = vmatpush1.msra.mxu0 0.0
    %378 = vmatprep.subr.mxu0 0.0
    %379 = vmatpush1.msra.mxu0 0.0
    %380 = vmatprep.subr.mxu0 0.0
    %381 = vmatpush1.msra.mxu0 0.0
    %382 = vmatprep.subr.mxu0 0.0
    %383 = vmatpush1.msra.mxu0 0.0
    %384 = vmatprep.subr.mxu0 0.0
    %385 = vmatpush1.msra.mxu0 0.0
    %386 = vmatprep.subr.mxu0 0.0
    %387 = vmatpush1.msra.mxu0 0.0
    %388 = vmatprep.subr.mxu0 0.0
    %389 = vmatpush1.msra.mxu0 0.0
    %390 = vmatprep.subr.mxu0 0.0
    %391 = vmatpush1.msra.mxu0 0.0
    %392 = vmatprep.subr.mxu0 0.0
    %393 = vmatpush1.msra.mxu0 0.0
    %394 = vmatprep.subr.mxu0 0.0
    %395 = vmatpush1.msra.mxu0 0.0
    %396 = vmatprep.subr.mxu0 0.0
    %397 = vmatpush1.msra.mxu0 0.0
    %398 = vmatprep.subr.mxu0 0.0
    %399 = vmatpush1.msra.mxu0 0.0
    %400 = vmatprep.subr.mxu0 0.0
    %401 = vmatpush1.msra.mxu0 0.0
    %402 = vmatprep.subr.mxu0 0.0
    %403 = vmatpush1.msra.mxu0 0.0
    %404 = vmatprep.subr.mxu0 0.0
    %405 = vmatpush1.msra.mxu0 0.0
    %406 = vmatprep.subr.mxu0 0.0
    %407 = vmatpush1.msra.mxu0 0.0
    %408 = vmatprep.subr.mxu0 0.0
    %409 = vmatpush1.msra.mxu0 0.0
    %410 = vmatprep.mubr.f32.mxu0 0.0
    %411 = vmatmul.mubr.f32.gmra.mrb[0].mxu0 %v341
    %v412 = vpop.f32.mrb[0].mxu0
    %v413 = vadd.f32 0.0, %v412
    %v414 = vpop.f32.mrb[0].mxu0
    %415 = vmatprep.mubr.f32.mxu0 0.0
    %416 = vmatmul.mubr.f32.gmra.mrb[0].mxu0 %v344
    %v417 = vpop.f32.mrb[0].mxu0
    %v418 = vadd.f32 0.0, %v417
    %v419 = vpop.f32.mrb[0].mxu0
    %420 = vdwg.mxu0
    %v421 = vlaneseq
    %v422 = vshrl.u32 %v421, 7
    %v423 = vsub.s32 0, %v422
    %v424 = vrot.slane %v335, %v423
    %v425 = vmul.f32 %v424, %v413
    %v426 = vmul.f32 %v424, %v418
    %427 = vmatprep.subr.mxu0 0.0
    %428 = vmatpush1.msra.mxu0 %v153
    %429 = vmatprep.subr.mxu0 0.0
    %430 = vmatpush1.msra.mxu0 %v154
    %431 = vmatprep.subr.mxu0 0.0
    %432 = vmatpush1.msra.mxu0 %v155
    %433 = vmatprep.subr.mxu0 0.0
    %434 = vmatpush1.msra.mxu0 %v156
    %435 = vmatprep.subr.mxu0 0.0
    %436 = vmatpush1.msra.mxu0 0.0
    %437 = vmatprep.subr.mxu0 0.0
    %438 = vmatpush1.msra.mxu0 0.0
    %439 = vmatprep.subr.mxu0 0.0
    %440 = vmatpush1.msra.mxu0 0.0
    %441 = vmatprep.subr.mxu0 0.0
    %442 = vmatpush1.msra.mxu0 0.0
    %443 = vmatprep.subr.mxu0 0.0
    %444 = vmatpush1.msra.mxu0 0.0
    %445 = vmatprep.subr.mxu0 0.0
    %446 = vmatpush1.msra.mxu0 0.0
    %447 = vmatprep.subr.mxu0 0.0
    %448 = vmatpush1.msra.mxu0 0.0
    %449 = vmatprep.subr.mxu0 0.0
    %450 = vmatpush1.msra.mxu0 0.0
    %451 = vmatprep.subr.mxu0 0.0
    %452 = vmatpush1.msra.mxu0 0.0
    %453 = vmatprep.subr.mxu0 0.0
    %454 = vmatpush1.msra.mxu0 0.0
    %455 = vmatprep.subr.mxu0 0.0
    %456 = vmatpush1.msra.mxu0 0.0
    %457 = vmatprep.subr.mxu0 0.0
    %458 = vmatpush1.msra.mxu0 0.0
    %459 = vmatprep.subr.mxu0 0.0
    %460 = vmatpush1.msra.mxu0 0.0
    %461 = vmatprep.subr.mxu0 0.0
    %462 = vmatpush1.msra.mxu0 0.0
    %463 = vmatprep.subr.mxu0 0.0
    %464 = vmatpush1.msra.mxu0 0.0
    %465 = vmatprep.subr.mxu0 0.0
    %466 = vmatpush1.msra.mxu0 0.0
    %467 = vmatprep.subr.mxu0 0.0
    %468 = vmatpush1.msra.mxu0 0.0
    %469 = vmatprep.subr.mxu0 0.0
    %470 = vmatpush1.msra.mxu0 0.0
    %471 = vmatprep.subr.mxu0 0.0
    %472 = vmatpush1.msra.mxu0 0.0
    %473 = vmatprep.subr.mxu0 0.0
    %474 = vmatpush1.msra.mxu0 0.0
    %475 = vmatprep.subr.mxu0 0.0
    %476 = vmatpush1.msra.mxu0 0.0
    %477 = vmatprep.subr.mxu0 0.0
    %478 = vmatpush1.msra.mxu0 0.0
    %479 = vmatprep.subr.mxu0 0.0
    %480 = vmatpush1.msra.mxu0 0.0
    %481 = vmatprep.subr.mxu0 0.0
    %482 = vmatpush1.msra.mxu0 0.0
    %483 = vmatprep.subr.mxu0 0.0
    %484 = vmatpush1.msra.mxu0 0.0
    %485 = vmatprep.subr.mxu0 0.0
    %486 = vmatpush1.msra.mxu0 0.0
    %487 = vmatprep.subr.mxu0 0.0
    %488 = vmatpush1.msra.mxu0 0.0
    %489 = vmatprep.subr.mxu0 0.0
    %490 = vmatpush1.msra.mxu0 0.0
    %491 = vmatprep.mubr.f32.mxu0 0.0
    %492 = vmatmul.mubr.f32.gmra.mrb[0].mxu0 %v341
    %v493 = vpop.f32.mrb[0].mxu0
    %v494 = vadd.f32 0.0, %v493
    %v495 = vpop.f32.mrb[0].mxu0
    %496 = vmatprep.mubr.f32.mxu0 0.0
    %497 = vmatmul.mubr.f32.gmra.mrb[0].mxu0 %v344
    %v498 = vpop.f32.mrb[0].mxu0
    %v499 = vadd.f32 0.0, %v498
    %v500 = vpop.f32.mrb[0].mxu0
    %501 = vdwg.mxu0
    %v502 = vlaneseq
    %v503 = vshrl.u32 %v502, 7
    %v504 = vsub.s32 0, %v503
    %v505 = vrot.slane %v336, %v504
    %v506 = vmul.f32 %v505, %v494
    %v507 = vmul.f32 %v505, %v499
    %v508 = vadd.f32 %v425, %v506
    %v509 = vadd.f32 %v426, %v507
    %510 = vmatprep.subr.mxu0 0.0
    %511 = vmatpush1.msra.mxu0 %v237
    %512 = vmatprep.subr.mxu0 0.0
    %513 = vmatpush1.msra.mxu0 %v238
    %514 = vmatprep.subr.mxu0 0.0
    %515 = vmatpush1.msra.mxu0 %v239
    %516 = vmatprep.subr.mxu0 0.0
    %517 = vmatpush1.msra.mxu0 %v240
    %518 = vmatprep.subr.mxu0 0.0
    %519 = vmatpush1.msra.mxu0 0.0
    %520 = vmatprep.subr.mxu0 0.0
    %521 = vmatpush1.msra.mxu0 0.0
    %522 = vmatprep.subr.mxu0 0.0
    %523 = vmatpush1.msra.mxu0 0.0
    %524 = vmatprep.subr.mxu0 0.0
    %525 = vmatpush1.msra.mxu0 0.0
    %526 = vmatprep.subr.mxu0 0.0
    %527 = vmatpush1.msra.mxu0 0.0
    %528 = vmatprep.subr.mxu0 0.0
    %529 = vmatpush1.msra.mxu0 0.0
    %530 = vmatprep.subr.mxu0 0.0
    %531 = vmatpush1.msra.mxu0 0.0
    %532 = vmatprep.subr.mxu0 0.0
    %533 = vmatpush1.msra.mxu0 0.0
    %534 = vmatprep.subr.mxu0 0.0
    %535 = vmatpush1.msra.mxu0 0.0
    %536 = vmatprep.subr.mxu0 0.0
    %537 = vmatpush1.msra.mxu0 0.0
    %538 = vmatprep.subr.mxu0 0.0
    %539 = vmatpush1.msra.mxu0 0.0
    %540 = vmatprep.subr.mxu0 0.0
    %541 = vmatpush1.msra.mxu0 0.0
    %542 = vmatprep.subr.mxu0 0.0
    %543 = vmatpush1.msra.mxu0 0.0
    %544 = vmatprep.subr.mxu0 0.0
    %545 = vmatpush1.msra.mxu0 0.0
    %546 = vmatprep.subr.mxu0 0.0
    %547 = vmatpush1.msra.mxu0 0.0
    %548 = vmatprep.subr.mxu0 0.0
    %549 = vmatpush1.msra.mxu0 0.0
    %550 = vmatprep.subr.mxu0 0.0
    %551 = vmatpush1.msra.mxu0 0.0
    %552 = vmatprep.subr.mxu0 0.0
    %553 = vmatpush1.msra.mxu0 0.0
    %554 = vmatprep.subr.mxu0 0.0
    %555 = vmatpush1.msra.mxu0 0.0
    %556 = vmatprep.subr.mxu0 0.0
    %557 = vmatpush1.msra.mxu0 0.0
    %558 = vmatprep.subr.mxu0 0.0
    %559 = vmatpush1.msra.mxu0 0.0
    %560 = vmatprep.subr.mxu0 0.0
    %561 = vmatpush1.msra.mxu0 0.0
    %562 = vmatprep.subr.mxu0 0.0
    %563 = vmatpush1.msra.mxu0 0.0
    %564 = vmatprep.subr.mxu0 0.0
    %565 = vmatpush1.msra.mxu0 0.0
    %566 = vmatprep.subr.mxu0 0.0
    %567 = vmatpush1.msra.mxu0 0.0
    %568 = vmatprep.subr.mxu0 0.0
    %569 = vmatpush1.msra.mxu0 0.0
    %570 = vmatprep.subr.mxu0 0.0
    %571 = vmatpush1.msra.mxu0 0.0
    %572 = vmatprep.subr.mxu0 0.0
    %573 = vmatpush1.msra.mxu0 0.0
    %574 = vmatprep.mubr.f32.mxu0 0.0
    %575 = vmatmul.mubr.f32.gmra.mrb[0].mxu0 %v341
    %v576 = vpop.f32.mrb[0].mxu0
    %v577 = vadd.f32 0.0, %v576
    %v578 = vpop.f32.mrb[0].mxu0
    %579 = vmatprep.mubr.f32.mxu0 0.0
    %580 = vmatmul.mubr.f32.gmra.mrb[0].mxu0 %v344
    %v581 = vpop.f32.mrb[0].mxu0
    %v582 = vadd.f32 0.0, %v581
    %v583 = vpop.f32.mrb[0].mxu0
    %584 = vdwg.mxu0
    %v585 = vlaneseq
    %v586 = vshrl.u32 %v585, 7
    %v587 = vsub.s32 0, %v586
    %v588 = vrot.slane %v337, %v587
    %v589 = vmul.f32 %v588, %v577
    %v590 = vmul.f32 %v588, %v582
    %v591 = vadd.f32 %v508, %v589
    %v592 = vadd.f32 %v509, %v590
    %v593 = vld [vmem:[%s6] sm:$0xff]
    %v594 = vld [vmem:[%s6 + $0x8] sm:$0xff]
    %596 = vset.pattern.permute.xlu0 0
    %597 = vperm.xlu0 %596, %v593
    %v598 = vpop.permute.xlu0 %597
    %601 = vset.pattern.permute.xlu0 0
    %602 = vperm.xlu0 %601, %v594
    %v603 = vpop.permute.xlu0 %602
    %v605 = vadd.f32 %v591, %v598
    %v606 = vadd.f32 %v592, %v603
    %vm607 = vcmask 523264
    %608 = vst.msk [vmem:[#allocation8] sm:$0xff] %vm607, %v605
    %609 = vst.msk [vmem:[#allocation8 + $0x8] sm:$0xff] %vm607, %v606
    // Predicated region
    $region42: #{tpu_custom_call.1} parent=1 // pred_check
      _
    $region43: #{tpu_custom_call.1} parent=1 // pred_check_branch
      %611 = sbr.rel (0) target = $region45
    $region44: #{tpu_custom_call.1} parent=1 // pred_region
      %s613 = ssub.s32 256, 256
      %614 = vsyncadd [#allocation4], %s613
      %s615 = sshll.u32 [#allocation8], 4
      %s616 = int_to_ptr.vmem [resolvable:$true] %s615
      %621 = dma.vmem_to_hbm [thread:$0]  %s616, 256, %s7, [#allocation4], 128, 128, 8
    $region45: #{tpu_custom_call.1} parent=1 // pred_fallthru
      _
    // Predicated region
    $region46: #{tpu_custom_call.1} parent=1 // pred_check
      _
    $region47: #{tpu_custom_call.1} parent=1 // pred_check_branch
      %623 = sbr.rel (0) target = $region49
    $region48: #{tpu_custom_call.1} parent=1 // pred_region
      %624 = dma.done [#allocation4], 256
    $region49: #{tpu_custom_call.1} parent=1 // pred_fallthru
      _
    %625 = vsyncpa [#allocation3], 1
    %626 = vsyncpa [#allocation6], 1
    %627 = vsyncpa [#allocation4], 1

</llo_original>
